<compile_context>
chip_gen: v7x
topology: tpu7x:2x2x1
jax: 0.10.0
libtpu: 0.0.40
codegen_flags: <defaults>
</compile_context>

<pallas_src>
import functools

import jax
import jax.numpy as jnp
from jax.experimental import pallas as pl
from jax.experimental.pallas import tpu as pltpu

_LANE = 128
_SUBLANE = 8


# ---------------------------------------------------------------------------
# Per-generation configuration (tile budget, scoped VMEM limit, native-dtype fold,
# dual-TensorCore row split).  Conservative defaults if the chip is unrecognized.
# ---------------------------------------------------------------------------
@functools.lru_cache(maxsize=1)
def _tpu_config():
    try:
        kind = jax.devices()[0].device_kind.lower()
    except Exception:  # pragma: no cover - defensive
        kind = ""
    if "v7" in kind or "7x" in kind:
        # 64 MiB VMEM per TC, 3.2 TB/s HBM, 2 TensorCores, bf16 VALU.
        return dict(tile_budget=8 << 20, vmem_limit=48 << 20,
                    native_fold=True, split_rows=True)
    if "v6" in kind:
        # 128 MiB VMEM, ~1.4 TB/s HBM, 1 TensorCore, bf16 VALU.
        return dict(tile_budget=8 << 20, vmem_limit=96 << 20,
                    native_fold=True, split_rows=False)
    if "v5e" in kind or "v5 lite" in kind or "v5lite" in kind:
        # 128 MiB VMEM but 16 MiB default scoped limit; no bf16 VALU.
        return dict(tile_budget=2 << 20, vmem_limit=64 << 20,
                    native_fold=False, split_rows=False)
    if "v5" in kind or "v4" in kind:
        # v5p / v4: megacore (2 cores), no bf16 VALU assumed.
        return dict(tile_budget=4 << 20, vmem_limit=64 << 20,
                    native_fold=False, split_rows=True)
    # Unknown / older chips: small tiles, keep the default scoped VMEM limit.
    return dict(tile_budget=2 << 20, vmem_limit=None,
                native_fold=False, split_rows=False)


# ---------------------------------------------------------------------------
# Pallas kernel: global min/max of a 2-D (rows, cols) array, tiled (tr, tk).
# Grid = (row_blocks, col_blocks); col (reduction) axis last / sequential.
# ---------------------------------------------------------------------------
def _aminmax_kernel(x_ref, min_out_ref, max_out_ref, min_acc, max_acc, *,
                    rows, cols, acc_rows, need_row_mask, need_col_mask):
    r = pl.program_id(0)
    k = pl.program_id(1)
    tr, tk = x_ref.shape
    acc_dtype = min_acc.dtype

    @pl.when(k == 0)
    def _init():
        min_acc[...] = jnp.full(min_acc.shape, jnp.inf, dtype=acc_dtype)
        max_acc[...] = jnp.full(max_acc.shape, -jnp.inf, dtype=acc_dtype)

    def _fold(t_min, t_max):
        # Sublane-group fold onto the small accumulator: layout-trivial reshape
        # (acc_rows == native sublane packing of acc_dtype, so slices are tile-
        # aligned) + leading-axis reduce -> pure VPU elementwise mins/maxes.
        if tr != acc_rows:
            t_min = t_min.reshape(tr // acc_rows, acc_rows, tk).min(axis=0)
            t_max = t_max.reshape(tr // acc_rows, acc_rows, tk).max(axis=0)
        min_acc[...] = jnp.minimum(min_acc[...], t_min)
        max_acc[...] = jnp.maximum(max_acc[...], t_max)

    if need_row_mask or need_col_mask:
        # Only edge tiles pay for masking; interior tiles take the mask-free path.
        is_edge = None
        if need_row_mask:
            is_edge = r == pl.num_programs(0) - 1
        if need_col_mask:
            e = k == pl.num_programs(1) - 1
            is_edge = e if is_edge is None else (is_edge | e)

        @pl.when(is_edge)
        def _edge_tile():
            t = x_ref[...].astype(acc_dtype)
            valid = None
            if need_row_mask:
                row_ids = r * tr + jax.lax.broadcasted_iota(jnp.int32, (tr, tk), 0)
                valid = row_ids < rows
            if need_col_mask:
                col_ids = k * tk + jax.lax.broadcasted_iota(jnp.int32, (tr, tk), 1)
                cvalid = col_ids < cols
                valid = cvalid if valid is None else (valid & cvalid)
            pos_inf = jnp.asarray(jnp.inf, dtype=acc_dtype)
            neg_inf = jnp.asarray(-jnp.inf, dtype=acc_dtype)
            _fold(jnp.where(valid, t, pos_inf), jnp.where(valid, t, neg_inf))

        @pl.when(jnp.logical_not(is_edge))
        def _interior_tile():
            t = x_ref[...].astype(acc_dtype)   # no-op when acc_dtype == input dtype
            _fold(t, t)
    else:
        t = x_ref[...].astype(acc_dtype)
        _fold(t, t)

    @pl.when(k == pl.num_programs(1) - 1)
    def _finalize():
        # Single cross-lane/sublane reduce per row block (cast only the small
        # accumulator to f32 here), written lane-dense (1,8,128).
        min_out_ref[...] = jnp.full(min_out_ref.shape,
                                    jnp.min(min_acc[...].astype(jnp.float32)),
                                    jnp.float32)
        max_out_ref[...] = jnp.full(max_out_ref.shape,
                                    jnp.max(max_acc[...].astype(jnp.float32)),
                                    jnp.float32)


def _choose_tiles(rows, cols, itemsize, tile_budget, row_align, split_rows):
    """Pick (tr, tk) so the input tile stays within `tile_budget` bytes.

    tk: full last dim if it fits, else a multiple of 128.  tr: full rows dim if it
    fits, else a multiple of `row_align` (the sublane packing of the accumulator
    dtype: 8 for f32, 16 for bf16).  On dual-TensorCore parts `split_rows` forces
    >=2 row blocks.  Tails are masked in-kernel (edge tiles only), never padded.
    """
    lane_cap = max(_LANE, min(((tile_budget // (_SUBLANE * itemsize)) // _LANE) * _LANE,
                              32768))
    tk = cols if cols <= lane_cap else lane_cap

    row_cap = max(row_align,
                  ((tile_budget // max(1, tk * itemsize)) // row_align) * row_align)
    if rows <= row_cap:
        if split_rows and rows >= 2 * row_align:
            # >=2 row blocks so both TensorCores get work (v7x / megacore).
            half = (rows + 1) // 2
            tr = ((half + row_align - 1) // row_align) * row_align
        elif rows <= row_align or rows % row_align == 0:
            tr = rows                                    # full dim (always legal)
        else:
            tr = (rows // row_align) * row_align         # aligned, masked tail block
    else:
        tr = row_cap
    return tr, tk


@functools.partial(
    jax.jit,
    static_argnames=("tile_budget", "native_fold", "split_rows", "vmem_limit"))
def _global_aminmax_impl(x, *, tile_budget, native_fold, split_rows, vmem_limit):
    """Global (ch_axis == -1) min/max of `x` via a tiled Pallas reduction."""
    if x.ndim < 2:
        x2 = x.reshape(1, -1)
    else:
        x2 = x.reshape(-1, x.shape[-1])                  # contiguous reshape: no HBM copy
    rows, cols = x2.shape
    itemsize = x2.dtype.itemsize

    # Accumulate in the native dtype on chips with bf16 VALU; otherwise f32.
    if native_fold and x2.dtype in (jnp.dtype(jnp.bfloat16), jnp.dtype(jnp.float32)):
        acc_dtype = x2.dtype
    else:
        acc_dtype = jnp.float32
    row_align = _SUBLANE * (4 // jnp.dtype(acc_dtype).itemsize)   # 8 (f32) / 16 (bf16)

    tr, tk = _choose_tiles(rows, cols, itemsize, tile_budget, row_align, split_rows)
    nr = (rows + tr - 1) // tr
    nk = (cols + tk - 1) // tk
    acc_rows = row_align if tr % row_align == 0 else tr
    need_row_mask = rows % tr != 0
    need_col_mask = cols % tk != 0

    kernel = functools.partial(_aminmax_kernel, rows=rows, cols=cols,
                               acc_rows=acc_rows,
                               need_row_mask=need_row_mask,
                               need_col_mask=need_col_mask)

    cp_kwargs = dict(dimension_semantics=("parallel", "arbitrary"))
    if vmem_limit is not None:
        cp_kwargs["vmem_limit_bytes"] = int(vmem_limit)

    part_shape = jax.ShapeDtypeStruct((nr, _SUBLANE, _LANE), jnp.float32)
    pmin, pmax = pl.pallas_call(
        kernel,
        out_shape=(part_shape, part_shape),
        grid_spec=pltpu.PrefetchScalarGridSpec(
            num_scalar_prefetch=0,
            grid=(nr, nk),
            in_specs=[pl.BlockSpec((tr, tk), lambda r, k: (r, k))],
            out_specs=[pl.BlockSpec((1, _SUBLANE, _LANE), lambda r, k: (r, 0, 0)),
                       pl.BlockSpec((1, _SUBLANE, _LANE), lambda r, k: (r, 0, 0))],
            scratch_shapes=[pltpu.VMEM((acc_rows, tk), acc_dtype),
                            pltpu.VMEM((acc_rows, tk), acc_dtype)],
        ),
        compiler_params=pltpu.CompilerParams(**cp_kwargs),
        cost_estimate=pl.CostEstimate(
            flops=2 * rows * cols,
            transcendentals=0,
            bytes_accessed=rows * cols * itemsize + 2 * nr * _SUBLANE * _LANE * 4),
    )(x2)

    # Tiny combine of the per-row-block partials (nr * 1024 f32 elements), same jit.
    return jnp.min(pmin), jnp.max(pmax)


def _global_aminmax(x, tile_budget=None):
    cfg = _tpu_config()
    if tile_budget is None:
        tile_budget = cfg["tile_budget"]
    return _global_aminmax_impl(x,
                                tile_budget=int(tile_budget),
                                native_fold=cfg["native_fold"],
                                split_rows=cfg["split_rows"],
                                vmem_limit=cfg["vmem_limit"])


# ---------------------------------------------------------------------------
# Observer (parameter-free module; buffers are min_val / max_val, counter cnt)
# ---------------------------------------------------------------------------
class AvgPruneMinMaxObserver:
    """Running *average* of per-batch global min/max (ch_axis == -1 only)."""

    def __init__(self, bit=8, symmetric=False, ch_axis=-1):
        self.bit = bit
        self.symmetric = symmetric
        self.ch_axis = ch_axis
        self.eps = jnp.asarray(1e-8, dtype=jnp.float32)
        if symmetric:
            self.quant_min = -(2 ** (bit - 1))
            self.quant_max = 2 ** (bit - 1) - 1
        else:
            self.quant_min = 0
            self.quant_max = 2 ** bit - 1
        self.min_val = jnp.asarray(jnp.inf, dtype=jnp.float32)
        self.max_val = jnp.asarray(-jnp.inf, dtype=jnp.float32)
        self.cnt = 0
        self.name = ""
        self.percentile = None

    def set_name(self, name):
        self.name = name

    def set_batch(self, batch):
        self.batch = batch

    def set_percentile(self, percentile):
        self.percentile = percentile

    # --- auxiliary paths (plain JAX; not the hot kernel) ------------------
    def quantile_range(self, x, percentile):
        upper = jnp.quantile(jnp.abs(x), percentile)
        return -upper, upper

    def prune_token(self, value):
        if "attention_probs" in self.name:
            return value
        token_max = jnp.max(value, axis=1)
        token_min = jnp.min(value, axis=1)
        _, upper_thr = self.quantile_range(token_max, self.percentile)
        lower_thr, _ = self.quantile_range(token_min, self.percentile)
        upper = jnp.max(jnp.where(token_max <= upper_thr, token_max, -jnp.inf))
        lower = jnp.min(jnp.where(token_min >= lower_thr, token_min, jnp.inf))
        return jnp.clip(value, lower, upper)

    def reshape_batch_embedding(self, x, seq_pos):
        pos = list(range(x.ndim))
        pos.remove(seq_pos)
        if len(pos) == 3:
            x = jnp.transpose(x, (pos[0], seq_pos, pos[1], pos[2]))
            x = x.reshape(x.shape[0], x.shape[1], -1)
        elif len(pos) == 2:
            x = jnp.transpose(x, (pos[0], seq_pos, pos[1]))
        return x.reshape(-1, x.shape[-1])                # == concat of per-batch sequences

    # --- forward ----------------------------------------------------------
    def forward(self, x_orig, observation_mask=None, seq_pos=-1):
        if x_orig.size == 0:
            return x_orig
        x = jnp.asarray(x_orig).astype(jnp.float32)      # .to(min_val.dtype); this is the return
        if observation_mask is not None:
            # TODO(synk): remove_padding needs ragged, data-dependent-shape gathers per
            # sequence; no clean jit/Pallas equivalent, so this path is not implemented.
            raise NotImplementedError("observation_mask path is not supported")
        elif seq_pos != -1:
            x = self.reshape_batch_embedding(x, seq_pos)
            x = self.prune_token(x)
        assert self.ch_axis == -1

        # Default path: feed the kernel the ORIGINAL-dtype tensor (cast/fold happens
        # in-kernel), so bf16/int inputs are not re-read as f32.  min/max commute with
        # the monotone cast, so the result is exact.
        if observation_mask is None and seq_pos == -1:
            kernel_in = jnp.asarray(x_orig)
        else:
            kernel_in = x
        cur_min, cur_max = _global_aminmax(kernel_in)

        # Running average of per-call min/max.  First call is detected with the Python
        # counter (no blocking isinf() readback / device sync; also avoids the silent
        # reset if a later batch legitimately produces +/-inf).
        if self.cnt == 0:
            self.min_val = cur_min
            self.max_val = cur_max
        else:
            self.min_val = (self.min_val * self.cnt + cur_min) / (self.cnt + 1)
            self.max_val = (self.max_val * self.cnt + cur_max) / (self.cnt + 1)
        self.cnt += 1
        return x

    # --- qparams (tiny scalar math; plain JAX) ------------------------------
    def calculate_qparams(self, min_val, max_val):
        min_val_neg = jnp.minimum(min_val, jnp.zeros_like(min_val))
        max_val_pos = jnp.maximum(max_val, jnp.zeros_like(max_val))
        if self.symmetric:
            max_val_pos = jnp.maximum(-min_val_neg, max_val_pos)
            scale = max_val_pos / (float(self.quant_max - self.quant_min) / 2)
            scale = jnp.maximum(scale, self.eps)
            zero_point = jnp.zeros_like(min_val_neg, dtype=jnp.int32)
        else:
            scale = (max_val_pos - min_val_neg) / float(self.quant_max - self.quant_min)
            scale = jnp.maximum(scale, self.eps)
            zero_point = self.quant_min - jnp.round(min_val_neg / scale)
            zero_point = jnp.clip(zero_point, self.quant_min, self.quant_max)
        return scale, zero_point


if __name__ == "__main__":
    key = jax.random.PRNGKey(0)
    k0, k1, k2, k3 = jax.random.split(key, 4)

    # --- default path on a small NCHW tensor -------------------------------
    x = jax.random.normal(k0, (2, 4, 16, 16), dtype=jnp.float32)
    obs = AvgPruneMinMaxObserver(bit=8, symmetric=False, ch_axis=-1)
    out = obs.forward(x)
    jax.block_until_ready(out)
    assert out.shape == x.shape and out.dtype == jnp.float32
    assert jnp.allclose(out, x)
    assert jnp.allclose(obs.min_val, jnp.min(x)), (obs.min_val, jnp.min(x))
    assert jnp.allclose(obs.max_val, jnp.max(x)), (obs.max_val, jnp.max(x))

    # second batch: running AVERAGE of per-batch min/max (AvgPruneMinMaxObserver semantics)
    x2 = 0.5 * jax.random.normal(k1, (2, 4, 16, 16), dtype=jnp.float32)
    obs.forward(x2)
    exp_min = (jnp.min(x) + jnp.min(x2)) / 2.0
    exp_max = (jnp.max(x) + jnp.max(x2)) / 2.0
    assert jnp.allclose(obs.min_val, exp_min, rtol=1e-6, atol=1e-6)
    assert jnp.allclose(obs.max_val, exp_max, rtol=1e-6, atol=1e-6)

    # --- multi-block grid + row/col tail masking (bf16, native-dtype in-kernel fold) ---
    xb = jax.random.normal(k2, (2, 65, 300), dtype=jnp.float32).astype(jnp.bfloat16)
    gmin, gmax = _global_aminmax(xb, tile_budget=4 * 1024)   # forces many blocks + edge masks
    jax.block_until_ready((gmin, gmax))
    assert jnp.allclose(gmin, jnp.min(xb.astype(jnp.float32)))
    assert jnp.allclose(gmax, jnp.max(xb.astype(jnp.float32)))

    # --- exercise the (tr > acc_rows) sublane-fold path + masked row tail ----------
    xc = jax.random.normal(k3, (8, 125, 256), dtype=jnp.float32)
    gmin2, gmax2 = _global_aminmax(xc, tile_budget=64 * 1024)  # tr=64, masked tail row block
    jax.block_until_ready((gmin2, gmax2))
    assert jnp.allclose(gmin2, jnp.min(xc))
    assert jnp.allclose(gmax2, jnp.max(xc))

    # qparams on the observed range
    scale, zp = obs.calculate_qparams(obs.min_val, obs.max_val)
    jax.block_until_ready((scale, zp))

    print("KERNEL_OK")
</pallas_src>

<mosaic_0001>
module attributes {stable_mosaic.version = 11 : i64} {
  func.func @_aminmax_kernel(%arg0: i32, %arg1: i32, %arg2: memref<128x16xf32, #tpu.memory_space<vmem>>, %arg3: memref<1x8x128xf32, #tpu.memory_space<vmem>>, %arg4: memref<1x8x128xf32, #tpu.memory_space<vmem>>, %arg5: memref<8x16xf32, #tpu.memory_space<vmem>>, %arg6: memref<8x16xf32, #tpu.memory_space<vmem>>) attributes {dimension_semantics = [#tpu.dimension_semantics<parallel>, #tpu.dimension_semantics<arbitrary>], iteration_bounds = array<i64: 1, 1>, scalar_prefetch = 0 : i64, scratch_operands = 2 : i64, tpu.core_type = #tpu.core_type<tc>, window_params = [{transform_indices = @transform_0, window_bounds = array<i64: 128, 16>}, {transform_indices = @transform_1, window_bounds = array<i64: 1, 8, 128>}, {transform_indices = @transform_2, window_bounds = array<i64: 1, 8, 128>}]} {
    %c0_i32 = arith.constant 0 : i32
    %0 = arith.cmpi eq, %arg1, %c0_i32 : i32
    %1 = arith.extui %0 : i1 to i32
    %c0_i32_0 = arith.constant 0 : i32
    %2 = arith.cmpi ne, %1, %c0_i32_0 : i32
    scf.if %2 {
      %cst_13 = arith.constant 0x7F800000 : f32
      %17 = vector.broadcast %cst_13 : f32 to vector<8x16xf32>
      %c0_14 = arith.constant 0 : index
      %c0_15 = arith.constant 0 : index
      %18 = vector.load %arg5[%c0_14, %c0_15] : memref<8x16xf32, #tpu.memory_space<vmem>>, vector<8x16xf32>
      tpu.vector_store %arg5[%c0_14, %c0_15], %17 {strides = array<i32>} : memref<8x16xf32, #tpu.memory_space<vmem>>, vector<8x16xf32>,
      %cst_16 = arith.constant 0xFF800000 : f32
      %19 = vector.broadcast %cst_16 : f32 to vector<8x16xf32>
      %c0_17 = arith.constant 0 : index
      %c0_18 = arith.constant 0 : index
      %20 = vector.load %arg6[%c0_17, %c0_18] : memref<8x16xf32, #tpu.memory_space<vmem>>, vector<8x16xf32>
      tpu.vector_store %arg6[%c0_17, %c0_18], %19 {strides = array<i32>} : memref<8x16xf32, #tpu.memory_space<vmem>>, vector<8x16xf32>,
    } else {
    }
    %c0 = arith.constant 0 : index
    %c0_1 = arith.constant 0 : index
    %3 = vector.load %arg2[%c0, %c0_1] : memref<128x16xf32, #tpu.memory_space<vmem>>, vector<128x16xf32>
    %4 = vector.shape_cast %3 : vector<128x16xf32> to vector<16x8x16xf32>
    %cst = arith.constant dense<0x7F800000> : vector<8x16xf32>
    %5 = vector.multi_reduction <minimumf>, %4, %cst [0] : vector<16x8x16xf32> to vector<8x16xf32>
    %6 = vector.shape_cast %3 : vector<128x16xf32> to vector<16x8x16xf32>
    %cst_2 = arith.constant dense<0xFF800000> : vector<8x16xf32>
    %7 = vector.multi_reduction <maximumf>, %6, %cst_2 [0] : vector<16x8x16xf32> to vector<8x16xf32>
    %c0_3 = arith.constant 0 : index
    %c0_4 = arith.constant 0 : index
    %8 = vector.load %arg5[%c0_3, %c0_4] : memref<8x16xf32, #tpu.memory_space<vmem>>, vector<8x16xf32>
    %9 = arith.minimumf %8, %5 : vector<8x16xf32>
    %c0_5 = arith.constant 0 : index
    %c0_6 = arith.constant 0 : index
    %10 = vector.load %arg5[%c0_5, %c0_6] : memref<8x16xf32, #tpu.memory_space<vmem>>, vector<8x16xf32>
    tpu.vector_store %arg5[%c0_5, %c0_6], %9 {strides = array<i32>} : memref<8x16xf32, #tpu.memory_space<vmem>>, vector<8x16xf32>,
    %c0_7 = arith.constant 0 : index
    %c0_8 = arith.constant 0 : index
    %11 = vector.load %arg6[%c0_7, %c0_8] : memref<8x16xf32, #tpu.memory_space<vmem>>, vector<8x16xf32>
    %12 = arith.maximumf %11, %7 : vector<8x16xf32>
    %c0_9 = arith.constant 0 : index
    %c0_10 = arith.constant 0 : index
    %13 = vector.load %arg6[%c0_9, %c0_10] : memref<8x16xf32, #tpu.memory_space<vmem>>, vector<8x16xf32>
    tpu.vector_store %arg6[%c0_9, %c0_10], %12 {strides = array<i32>} : memref<8x16xf32, #tpu.memory_space<vmem>>, vector<8x16xf32>,
    %c0_i32_11 = arith.constant 0 : i32
    %14 = arith.cmpi eq, %arg1, %c0_i32_11 : i32
    %15 = arith.extui %14 : i1 to i32
    %c0_i32_12 = arith.constant 0 : i32
    %16 = arith.cmpi ne, %15, %c0_i32_12 : i32
    scf.if %16 {
      %c0_13 = arith.constant 0 : index
      %c0_14 = arith.constant 0 : index
      %17 = vector.load %arg5[%c0_13, %c0_14] : memref<8x16xf32, #tpu.memory_space<vmem>>, vector<8x16xf32>
      %18 = vector.shape_cast %17 : vector<8x16xf32> to vector<1x8x16xf32>
      %cst_15 = arith.constant dense<0x7F800000> : vector<1xf32>
      %19 = vector.multi_reduction <minimumf>, %18, %cst_15 [1, 2] : vector<1x8x16xf32> to vector<1xf32>
      %20 = vector.shape_cast %19 : vector<1xf32> to vector<1x1x1xf32>
      %21 = vector.extract %20[0, 0, 0] : f32 from vector<1x1x1xf32>
      %22 = vector.broadcast %21 : f32 to vector<1x8x128xf32>
      %c0_16 = arith.constant 0 : index
      %c0_17 = arith.constant 0 : index
      %c0_18 = arith.constant 0 : index
      %23 = vector.load %arg3[%c0_16, %c0_17, %c0_18] : memref<1x8x128xf32, #tpu.memory_space<vmem>>, vector<1x8x128xf32>
      tpu.vector_store %arg3[%c0_16, %c0_17, %c0_18], %22 {strides = array<i32>} : memref<1x8x128xf32, #tpu.memory_space<vmem>>, vector<1x8x128xf32>,
      %c0_19 = arith.constant 0 : index
      %c0_20 = arith.constant 0 : index
      %24 = vector.load %arg6[%c0_19, %c0_20] : memref<8x16xf32, #tpu.memory_space<vmem>>, vector<8x16xf32>
      %25 = vector.shape_cast %24 : vector<8x16xf32> to vector<1x8x16xf32>
      %cst_21 = arith.constant dense<0xFF800000> : vector<1xf32>
      %26 = vector.multi_reduction <maximumf>, %25, %cst_21 [1, 2] : vector<1x8x16xf32> to vector<1xf32>
      %27 = vector.shape_cast %26 : vector<1xf32> to vector<1x1x1xf32>
      %28 = vector.extract %27[0, 0, 0] : f32 from vector<1x1x1xf32>
      %29 = vector.broadcast %28 : f32 to vector<1x8x128xf32>
      %c0_22 = arith.constant 0 : index
      %c0_23 = arith.constant 0 : index
      %c0_24 = arith.constant 0 : index
      %30 = vector.load %arg4[%c0_22, %c0_23, %c0_24] : memref<1x8x128xf32, #tpu.memory_space<vmem>>, vector<1x8x128xf32>
      tpu.vector_store %arg4[%c0_22, %c0_23, %c0_24], %29 {strides = array<i32>} : memref<1x8x128xf32, #tpu.memory_space<vmem>>, vector<1x8x128xf32>,
    } else {
    }
    return
  }
  func.func @transform_0(%arg0: i32, %arg1: i32) -> (i32, i32) {
    %c0_i32 = arith.constant 0 : i32
    return %arg0, %arg1 : i32, i32
  }
  func.func @transform_1(%arg0: i32, %arg1: i32) -> (i32, i32, i32) {
    %c0_i32 = arith.constant 0 : i32
    %c0_i32_0 = arith.constant 0 : i32
    %c0_i32_1 = arith.constant 0 : i32
    return %arg0, %c0_i32, %c0_i32_0 : i32, i32, i32
  }
  func.func @transform_2(%arg0: i32, %arg1: i32) -> (i32, i32, i32) {
    %c0_i32 = arith.constant 0 : i32
    %c0_i32_0 = arith.constant 0 : i32
    %c0_i32_1 = arith.constant 0 : i32
    return %arg0, %c0_i32, %c0_i32_0 : i32, i32, i32
  }
}

</mosaic_0001>

<llo_original>
// kernel: _global_aminmax_impl.1
$region0: #{_global_aminmax_impl.1}
  #allocation0 [shape = 'u32[]', space=smem, size = 0x4, offset = 0x4, fixed_abs, tag = 'smem constant byte address 0x4 - core index']
  #allocation1 [shape = 'u32[144,128]{1,0:T(1,128)}', space=vmem, size = 0x12000, scoped, tag = 'internal scratch']
  #allocation2 [shape = 'f32[8,16]{1,0:T(8,128)}', space=vmem, size = 0x1000, scoped, tag = 'scratch operand']
  #allocation3 [shape = 'f32[8,16]{1,0:T(8,128)}', space=vmem, size = 0x1000, scoped, tag = 'scratch operand']
  %s0 = inlined_call_operand.hbm [shape: f32[128,16], index: 0, kind: input, shape index: {}]
  %s1 = inlined_call_operand.vmem [shape: f32[1,8,128], index: 1, kind: output, shape index: {0}]
  %s2 = inlined_call_operand.vmem [shape: f32[1,8,128], index: 2, kind: output, shape index: {1}]
  %3 = xla_tuple %s1, %s2
  %s4 = sld [smem:[#allocation0]]
  $region34: #{_global_aminmax_impl.1} parent=0
    _
  %s6 = ssub.s32 1, %s4
  %s7 = scalar_select 0, %s6, %s4
  $region1: #{_global_aminmax_impl.1} parent=0
    #allocation4 [shape = 'u8[65536]{0}', space=vmem, size = 0x10000, scoped, tag = 'input window, operand 0, single buffered']
    #allocation5 [shape = 's32[1]{0}', space=sflag, size = 0x4, scoped, tag = 'scoped memory for _global_aminmax_impl.1']
    %8 = vsyncpa [#allocation5], 0
    // Predicated region
    $region2: #{_global_aminmax_impl.1} parent=1 // pred_check
      _
    $region3: #{_global_aminmax_impl.1} parent=1 // pred_check_branch
      %10 = sbr.rel (0) target = $region5
    $region4: #{_global_aminmax_impl.1} parent=1 // pred_region
      %s12 = ssub.s32 2048, 2048
      %13 = vsyncadd [#allocation5], %s12
      %s14 = sshll.u32 [#allocation4], 4
      %s15 = int_to_ptr.vmem [resolvable:$true] %s14
      %20 = dma.hbm_to_vmem [thread:$0]  %s0, 2048, %s15, [#allocation5], 128, 128, 8
    $region5: #{_global_aminmax_impl.1} parent=1 // pred_fallthru
      _
    // Predicated region
    $region6: #{_global_aminmax_impl.1} parent=1 // pred_check
      _
    $region7: #{_global_aminmax_impl.1} parent=1 // pred_check_branch
      %22 = sbr.rel (0) target = $region9
    $region8: #{_global_aminmax_impl.1} parent=1 // pred_region
      %23 = dma.done [#allocation5], 2048
    $region9: #{_global_aminmax_impl.1} parent=1 // pred_fallthru
      _
    %p24 = scmp.eq.s32.totalorder 0, 0
    // Predicated region
    $region10: #{_global_aminmax_impl.1} parent=1 // pred_check
      %p25 = pneg %p24
    $region11: #{_global_aminmax_impl.1} parent=1 // pred_check_branch
      %27 = sbr.rel (%p25) target = $region13
    $region12: #{_global_aminmax_impl.1} parent=1 // pred_region
      %vm28 = vcmask 130048
      %29 = vst.msk [vmem:[#allocation2] sm:$0xff] %vm28, inf
      %30 = vst.msk [vmem:[#allocation3] sm:$0xff] %vm28, -inf
    $region13: #{_global_aminmax_impl.1} parent=1 // pred_fallthru
      _
    %v31 = vld [vmem:[#allocation4] sm:$0xff]
    %v32 = vld [vmem:[#allocation4 + $0x8] sm:$0xff]
    %v33 = vld [vmem:[#allocation4 + $0x10] sm:$0xff]
    %v34 = vld [vmem:[#allocation4 + $0x18] sm:$0xff]
    %v35 = vld [vmem:[#allocation4 + $0x20] sm:$0xff]
    %v36 = vld [vmem:[#allocation4 + $0x28] sm:$0xff]
    %v37 = vld [vmem:[#allocation4 + $0x30] sm:$0xff]
    %v38 = vld [vmem:[#allocation4 + $0x38] sm:$0xff]
    %v39 = vld [vmem:[#allocation4 + $0x40] sm:$0xff]
    %v40 = vld [vmem:[#allocation4 + $0x48] sm:$0xff]
    %v41 = vld [vmem:[#allocation4 + $0x50] sm:$0xff]
    %v42 = vld [vmem:[#allocation4 + $0x58] sm:$0xff]
    %v43 = vld [vmem:[#allocation4 + $0x60] sm:$0xff]
    %v44 = vld [vmem:[#allocation4 + $0x68] sm:$0xff]
    %v45 = vld [vmem:[#allocation4 + $0x70] sm:$0xff]
    %v46 = vld [vmem:[#allocation4 + $0x78] sm:$0xff]
    %vm47 = vcmask 130048
    %v48 = vsel %vm47, %v31, inf
    %v49 = vsel %vm47, %v32, inf
    %v50 = vsel %vm47, %v33, inf
    %v51 = vsel %vm47, %v34, inf
    %v52 = vsel %vm47, %v35, inf
    %v53 = vmin.f32 %v48, %v52
    %v54 = vsel %vm47, %v36, inf
    %v55 = vmin.f32 %v49, %v54
    %v56 = vsel %vm47, %v37, inf
    %v57 = vmin.f32 %v50, %v56
    %v58 = vsel %vm47, %v38, inf
    %v59 = vmin.f32 %v51, %v58
    %v60 = vsel %vm47, %v39, inf
    %v61 = vmin.f32 %v53, %v60
    %v62 = vsel %vm47, %v40, inf
    %v63 = vmin.f32 %v55, %v62
    %v64 = vsel %vm47, %v41, inf
    %v65 = vmin.f32 %v57, %v64
    %v66 = vsel %vm47, %v42, inf
    %v67 = vmin.f32 %v59, %v66
    %v68 = vsel %vm47, %v43, inf
    %v69 = vmin.f32 %v61, %v68
    %v70 = vsel %vm47, %v44, inf
    %v71 = vmin.f32 %v63, %v70
    %v72 = vsel %vm47, %v45, inf
    %v73 = vmin.f32 %v65, %v72
    %v74 = vsel %vm47, %v46, inf
    %v75 = vmin.f32 %v67, %v74
    %v76 = vmin.f32 %v69, %v71
    %v77 = vmin.f32 %v73, %v75
    %v78 = vmin.f32 %v76, %v77
    %v79 = vsel %vm47, %v31, -inf
    %v80 = vsel %vm47, %v32, -inf
    %v81 = vsel %vm47, %v33, -inf
    %v82 = vsel %vm47, %v34, -inf
    %v83 = vsel %vm47, %v35, -inf
    %v84 = vmax.f32 %v79, %v83
    %v85 = vsel %vm47, %v36, -inf
    %v86 = vmax.f32 %v80, %v85
    %v87 = vsel %vm47, %v37, -inf
    %v88 = vmax.f32 %v81, %v87
    %v89 = vsel %vm47, %v38, -inf
    %v90 = vmax.f32 %v82, %v89
    %v91 = vsel %vm47, %v39, -inf
    %v92 = vmax.f32 %v84, %v91
    %v93 = vsel %vm47, %v40, -inf
    %v94 = vmax.f32 %v86, %v93
    %v95 = vsel %vm47, %v41, -inf
    %v96 = vmax.f32 %v88, %v95
    %v97 = vsel %vm47, %v42, -inf
    %v98 = vmax.f32 %v90, %v97
    %v99 = vsel %vm47, %v43, -inf
    %v100 = vmax.f32 %v92, %v99
    %v101 = vsel %vm47, %v44, -inf
    %v102 = vmax.f32 %v94, %v101
    %v103 = vsel %vm47, %v45, -inf
    %v104 = vmax.f32 %v96, %v103
    %v105 = vsel %vm47, %v46, -inf
    %v106 = vmax.f32 %v98, %v105
    %v107 = vmax.f32 %v100, %v102
    %v108 = vmax.f32 %v104, %v106
    %v109 = vmax.f32 %v107, %v108
    %v110 = vld [vmem:[#allocation2] sm:$0xff]
    %v111 = vmin.f32 %v110, %v78
    %112 = vst.msk [vmem:[#allocation2] sm:$0xff] %vm47, %v111
    %v113 = vld [vmem:[#allocation3] sm:$0xff]
    %v114 = vmax.f32 %v113, %v109
    %115 = vst.msk [vmem:[#allocation3] sm:$0xff] %vm47, %v114
    // Predicated region
    $region14: #{_global_aminmax_impl.1} parent=1 // pred_check
      %p116 = pneg %p24
    $region15: #{_global_aminmax_impl.1} parent=1 // pred_check_branch
      %118 = sbr.rel (%p116) target = $region17
    $region16: #{_global_aminmax_impl.1} parent=1 // pred_region
      %v119 = vld [vmem:[#allocation2] sm:$0xff]
      %v120 = vsel %vm47, %v119, inf
      %121 = vmin.xlane.f32.xlu0 %v120
      %v122 = vpop.xlane.xlu0 %121
      %v123 = vrot.slane %v122, 4
      %v124 = vmin.f32 %v122, %v123
      %v125 = vrot.slane %v124, 2
      %v126 = vmin.f32 %v124, %v125
      %v127 = vrot.slane %v126, 1
      %v128 = vmin.f32 %v126, %v127
      %s129 = vtos %v128
      %v130 = vstv %s129
      %131 = vst [vmem:[%s1] sm:$0xff] %v130
      %v132 = vld [vmem:[#allocation3] sm:$0xff]
      %v133 = vsel %vm47, %v132, -inf
      %134 = vmax.xlane.f32.xlu0 %v133
      %v135 = vpop.xlane.xlu0 %134
      %v136 = vrot.slane %v135, 4
      %v137 = vmax.f32 %v135, %v136
      %v138 = vrot.slane %v137, 2
      %v139 = vmax.f32 %v137, %v138
      %v140 = vrot.slane %v139, 1
      %v141 = vmax.f32 %v139, %v140
      %s142 = vtos %v141
      %v143 = vstv %s142
      %144 = vst [vmem:[%s2] sm:$0xff] %v143
    $region17: #{_global_aminmax_impl.1} parent=1 // pred_fallthru
      _
    // Predicated region
    $region18: #{_global_aminmax_impl.1} parent=1 // pred_check
      _
    $region19: #{_global_aminmax_impl.1} parent=1 // pred_check_branch
      %146 = sbr.rel (0) target = $region21
    $region20: #{_global_aminmax_impl.1} parent=1 // pred_region
      _
    $region21: #{_global_aminmax_impl.1} parent=1 // pred_fallthru
      _
    // Predicated region
    $region22: #{_global_aminmax_impl.1} parent=1 // pred_check
      _
    $region23: #{_global_aminmax_impl.1} parent=1 // pred_check_branch
      %148 = sbr.rel (0) target = $region25
    $region24: #{_global_aminmax_impl.1} parent=1 // pred_region
      _
    $region25: #{_global_aminmax_impl.1} parent=1 // pred_fallthru
      _
    // Predicated region
    $region26: #{_global_aminmax_impl.1} parent=1 // pred_check
      _
    $region27: #{_global_aminmax_impl.1} parent=1 // pred_check_branch
      %150 = sbr.rel (0) target = $region29
    $region28: #{_global_aminmax_impl.1} parent=1 // pred_region
      _
    $region29: #{_global_aminmax_impl.1} parent=1 // pred_fallthru
      _
    // Predicated region
    $region30: #{_global_aminmax_impl.1} parent=1 // pred_check
      _
    $region31: #{_global_aminmax_impl.1} parent=1 // pred_check_branch
      %152 = sbr.rel (0) target = $region33
    $region32: #{_global_aminmax_impl.1} parent=1 // pred_region
      _
    $region33: #{_global_aminmax_impl.1} parent=1 // pred_fallthru
      _
    %153 = vsyncpa [#allocation5], 1

</llo_original>
